<compile_context>
chip_gen: v7x
topology: tpu7x:2x2x1
jax: 0.10.0
libtpu: 0.0.40
codegen_flags: <defaults>
</compile_context>

<pallas_src>
import jax
import jax.numpy as jnp
from jax import lax
from jax.experimental import pallas as pl
from jax.experimental.pallas import tpu as pltpu


def conv_gru_cell_pallas_nlc(x, h, wx, bx, wy, by, kernel_size, *,
                             compute_dtype=None, target_m=256):
    """Fused ConvGRUCell forward, channels-last.

    Args:
      x : (B, L, Cin) input, channels-last
      h : (B, L, H)   hidden state, channels-last
      wx: (2H, Cin+H, K) conv_x weight (PyTorch layout), bx: (2H,)
      wy: (H,  Cin+H, K) conv_y weight (PyTorch layout), by: (H,)
      compute_dtype: dtype of the matmul operands (e.g. jnp.bfloat16 on
        v6e/v7x); accumulation and the recurrent state update are always f32.
      target_m: desired matmul M dimension (rows per grid step).
    Returns:
      h_new: (B, L, H)
    """
    B, L, Cin = x.shape
    H = h.shape[-1]
    K = int(kernel_size)
    assert K % 2 == 1, "PyTorch Conv1d padding=K//2 'same' semantics assume odd K"
    pad = K // 2
    assert pad <= 8, "halo scratch supports kernel_size up to 17"
    C = Cin + H
    G = 3 * H
    out_dtype = h.dtype
    if compute_dtype is None:
        compute_dtype = x.dtype
    halo = 8 if jnp.dtype(compute_dtype).itemsize >= 4 else 16

    # ---- batch folding: Bb batch elements per grid step -> M = Bb*L rows ----
    Bb = max(1, min(B, pl.cdiv(target_m, L)))
    while (Bb * L) % 8 != 0:          # keep the row-block sublane aligned
        Bb += 1
    Bpad = pl.cdiv(B, Bb) * Bb
    TM = Bb * L
    grid = (Bpad // Bb,)

    # ---- operands: 2-D, rows = flattened (batch, position) ------------------
    xh = jnp.concatenate([x, h], axis=-1).astype(compute_dtype).reshape(B * L, C)
    hf = h.astype(jnp.float32).reshape(B * L, H)          # f32 state, separate
    if Bpad != B:
        extra = (Bpad - B) * L
        xh = jnp.pad(xh, ((0, extra), (0, 0)))
        hf = jnp.pad(hf, ((0, extra), (0, 0)))
    # per-row position within its batch element (for conv-edge / batch masks)
    pos = jnp.tile(jnp.arange(L, dtype=jnp.int32), Bpad).reshape(Bpad * L, 1)

    # ---- fused weights: PyTorch (Cout, Cin_total, K) -> (K, Cin_total, Cout) -
    wx_t = jnp.transpose(wx, (2, 1, 0))                    # (K, C, 2H) gates a|b
    wy_t = jnp.transpose(wy, (2, 1, 0))                    # (K, C, H)
    ch_mask = (jnp.arange(C) < Cin)[None, :, None]
    wyx = jnp.where(ch_mask, wy_t, 0.0)                    # h-channel rows zeroed
    w1 = jnp.concatenate([wx_t, wyx], axis=-1).astype(compute_dtype)  # (K, C, 3H)
    wyh = wy_t[:, Cin:, :].astype(compute_dtype)           # (K, H, H) acts on b*h
    b_all = jnp.concatenate([bx, by]).reshape(1, G).astype(jnp.float32)

    def kernel(xh_ref, h_ref, pos_ref, w1_ref, wyh_ref, b_ref, out_ref,
               xh_pad, bh_pad):
        base = halo - pad
        pos_i = pos_ref[...]                               # (TM, 1) int32

        # Per-tap validity masks, shared by both passes: rows whose shifted
        # source position falls outside [0, L) of the SAME batch element
        # contribute zero ('same' padding + no cross-batch leakage).
        masks = []
        for k in range(K):
            d = k - pad
            if d == 0:
                masks.append(None)
            else:
                valid = (pos_i + d >= 0) & (pos_i + d < L)
                masks.append(valid.astype(jnp.float32))    # (TM, 1)

        # Padded copy of the fused [x|h] operand.  Halo rows are zeroed every
        # step (tiny: a couple of vregs); interior store is tile-aligned.
        xh_pad[:halo, :] = jnp.zeros((halo, C), dtype=xh_pad.dtype)
        xh_pad[halo + TM:halo + TM + halo, :] = jnp.zeros((halo, C), dtype=xh_pad.dtype)
        xh_pad[halo:halo + TM, :] = xh_ref[...]

        # ---- pass 1: conv_x (gates a, b) + conv_y's x-channel part ---------
        acc = jnp.zeros((TM, G), jnp.float32)
        for k in range(K):                                 # K static -> unrolled
            win = xh_pad[base + k:base + k + TM, :]        # (TM, C) shifted window
            r = jnp.dot(win, w1_ref[k], preferred_element_type=jnp.float32)
            if masks[k] is not None:
                r = r * masks[k]
            acc = acc + r
        acc = acc + b_ref[...]                             # fused (1, 3H) bias

        a = jax.nn.sigmoid(acc[:, :H])
        b = jax.nn.sigmoid(acc[:, H:2 * H])
        acc_y = acc[:, 2 * H:]                             # conv_y x-part (+bias)

        h_cur = h_ref[...]                                 # (TM, H) f32 state
        bh = (b * h_cur).astype(bh_pad.dtype)

        bh_pad[:halo, :] = jnp.zeros((halo, H), dtype=bh_pad.dtype)
        bh_pad[halo + TM:halo + TM + halo, :] = jnp.zeros((halo, H), dtype=bh_pad.dtype)
        bh_pad[halo:halo + TM, :] = bh

        # ---- pass 2: conv_y's (b*h) part ------------------------------------
        for k in range(K):
            r = jnp.dot(bh_pad[base + k:base + k + TM, :], wyh_ref[k],
                        preferred_element_type=jnp.float32)
            if masks[k] is not None:
                r = r * masks[k]
            acc_y = acc_y + r

        y = jnp.tanh(acc_y)
        h_new = a * h_cur + (1.0 - a) * y                  # true f32 state update
        out_ref[...] = h_new.astype(out_ref.dtype)

    out = pl.pallas_call(
        kernel,
        out_shape=jax.ShapeDtypeStruct((Bpad * L, H), out_dtype),
        grid_spec=pltpu.PrefetchScalarGridSpec(
            num_scalar_prefetch=0,
            grid=grid,
            in_specs=[
                pl.BlockSpec((TM, C), lambda i: (i, 0)),       # xh (fused)
                pl.BlockSpec((TM, H), lambda i: (i, 0)),       # h (f32)
                pl.BlockSpec((TM, 1), lambda i: (i, 0)),       # pos
                pl.BlockSpec((K, C, G), lambda i: (0, 0, 0)),  # fused pass-1 W
                pl.BlockSpec((K, H, H), lambda i: (0, 0, 0)),  # conv_y (b*h) W
                pl.BlockSpec((1, G), lambda i: (0, 0)),        # fused bias
            ],
            out_specs=pl.BlockSpec((TM, H), lambda i: (i, 0)),
            scratch_shapes=[
                pltpu.VMEM((halo + TM + halo, C), compute_dtype),
                pltpu.VMEM((halo + TM + halo, H), compute_dtype),
            ],
        ),
        compiler_params=pltpu.CompilerParams(
            dimension_semantics=("parallel",)),
    )(xh, hf, pos, w1, wyh, b_all)

    return out[:B * L].reshape(B, L, H)


def conv_gru_cell_pallas(x_ncl, h_ncl, wx, bx, wy, by, kernel_size, *,
                         compute_dtype=None, target_m=256):
    """NCL (PyTorch layout) compatibility wrapper: (B, C, L) in / (B, H, L) out.

    In a real pipeline prefer conv_gru_cell_pallas_nlc and keep activations
    channels-last end-to-end to avoid the boundary transposes.
    """
    x = jnp.transpose(x_ncl, (0, 2, 1))    # (B, L, Cin)
    h = jnp.transpose(h_ncl, (0, 2, 1))    # (B, L, H)
    out = conv_gru_cell_pallas_nlc(x, h, wx, bx, wy, by, kernel_size,
                                   compute_dtype=compute_dtype,
                                   target_m=target_m)
    return jnp.transpose(out, (0, 2, 1))   # back to (B, H, L)


# ---------------- pure-JAX reference (PyTorch NCL semantics) ----------------
def _conv1d_ref(inp, w, b, pad):
    # inp: (B, C, L), w: (Cout, Cin, K), b: (Cout,)
    out = lax.conv_general_dilated(
        inp, w, window_strides=(1,), padding=[(pad, pad)],
        dimension_numbers=("NCH", "OIH", "NCH"))
    return out + b[None, :, None]


def conv_gru_cell_ref(x, h, wx, bx, wy, by, kernel_size):
    pad = kernel_size // 2
    H = h.shape[1]
    xh = jnp.concatenate([x, h], axis=1)
    cx = _conv1d_ref(xh, wx, bx, pad)
    a = jax.nn.sigmoid(cx[:, :H, :])
    b = jax.nn.sigmoid(cx[:, H:2 * H, :])
    y_in = jnp.concatenate([x, b * h], axis=1)
    y = jnp.tanh(_conv1d_ref(y_in, wy, by, pad))
    return a * h + (1.0 - a) * y


if __name__ == "__main__":
    B, Cin, H, L, K = 2, 4, 32, 16, 3
    key = jax.random.PRNGKey(0)
    k1, k2, k3, k4, k5, k6, k7, k8 = jax.random.split(key, 8)

    # deterministic synthetic parameters (PyTorch weight layout: (Cout, Cin, K))
    wx = 0.1 * jax.random.normal(k1, (2 * H, Cin + H, K), dtype=jnp.float32)
    bx = 0.1 * jax.random.normal(k2, (2 * H,), dtype=jnp.float32)
    wy = 0.1 * jax.random.normal(k3, (H, Cin + H, K), dtype=jnp.float32)
    by = 0.1 * jax.random.normal(k4, (H,), dtype=jnp.float32)

    x = jax.random.normal(k5, (B, Cin, L), dtype=jnp.float32)
    h = jax.random.normal(k6, (B, H, L), dtype=jnp.float32)

    h_ref = conv_gru_cell_ref(x, h, wx, bx, wy, by, K)

    # f32 compute path: exact check (also exercises the in-block batch fold:
    # both batch elements share one grid step, so the cross-batch masking of
    # the shifted conv windows is covered).
    h_new = conv_gru_cell_pallas(x, h, wx, bx, wy, by, K)
    h_new = jax.block_until_ready(h_new)
    assert h_new.shape == (B, H, L)
    err = float(jnp.max(jnp.abs(h_new - h_ref)))
    assert jnp.allclose(h_new, h_ref, atol=1e-5, rtol=1e-5), err

    # Odd batch + small target_m: exercises batch padding and a multi-step grid.
    x3 = jax.random.normal(k7, (3, Cin, L), dtype=jnp.float32)
    h3 = jax.random.normal(k8, (3, H, L), dtype=jnp.float32)
    h3_ref = conv_gru_cell_ref(x3, h3, wx, bx, wy, by, K)
    h3_new = conv_gru_cell_pallas(x3, h3, wx, bx, wy, by, K, target_m=32)
    h3_new = jax.block_until_ready(h3_new)
    err3 = float(jnp.max(jnp.abs(h3_new - h3_ref)))
    assert jnp.allclose(h3_new, h3_ref, atol=1e-5, rtol=1e-5), err3

    # bf16 matmul-operand path (v6e/v7x MXU throughput); state update stays f32.
    h_bf = conv_gru_cell_pallas(x, h, wx, bx, wy, by, K,
                                compute_dtype=jnp.bfloat16)
    h_bf = jax.block_until_ready(h_bf)
    err_bf = float(jnp.max(jnp.abs(h_bf - h_ref)))
    assert jnp.allclose(h_bf, h_ref, atol=1e-1, rtol=1e-1), err_bf

    print("KERNEL_OK")
</pallas_src>

<mosaic_0001>
module attributes {stable_mosaic.version = 11 : i64} {
  func.func @kernel(%arg0: i32, %arg1: memref<32x36xf32, #tpu.memory_space<vmem>>, %arg2: memref<32x32xf32, #tpu.memory_space<vmem>>, %arg3: memref<32x1xi32, #tpu.memory_space<vmem>>, %arg4: memref<3x36x96xf32, #tpu.memory_space<vmem>>, %arg5: memref<3x32x32xf32, #tpu.memory_space<vmem>>, %arg6: memref<1x96xf32, #tpu.memory_space<vmem>>, %arg7: memref<32x32xf32, #tpu.memory_space<vmem>>, %arg8: memref<48x36xf32, #tpu.memory_space<vmem>>, %arg9: memref<48x32xf32, #tpu.memory_space<vmem>>) attributes {dimension_semantics = [#tpu.dimension_semantics<parallel>], iteration_bounds = array<i64: 1>, scalar_prefetch = 0 : i64, scratch_operands = 2 : i64, tpu.core_type = #tpu.core_type<tc>, window_params = [{transform_indices = @transform_0, window_bounds = array<i64: 32, 36>}, {transform_indices = @transform_1, window_bounds = array<i64: 32, 32>}, {transform_indices = @transform_2, window_bounds = array<i64: 32, 1>}, {pipeline_mode = #tpu.pipeline_mode<synchronous>, transform_indices = @transform_3, window_bounds = array<i64: 3, 36, 96>}, {pipeline_mode = #tpu.pipeline_mode<synchronous>, transform_indices = @transform_4, window_bounds = array<i64: 3, 32, 32>}, {pipeline_mode = #tpu.pipeline_mode<synchronous>, transform_indices = @transform_5, window_bounds = array<i64: 1, 96>}, {transform_indices = @transform_6, window_bounds = array<i64: 32, 32>}]} {
    %c0 = arith.constant 0 : index
    %c0_0 = arith.constant 0 : index
    %0 = vector.load %arg3[%c0, %c0_0] : memref<32x1xi32, #tpu.memory_space<vmem>>, vector<32x1xi32>
    %c-1_i32 = arith.constant -1 : i32
    %1 = vector.broadcast %c-1_i32 : i32 to vector<32x1xi32>
    %2 = arith.addi %0, %1 : vector<32x1xi32>
    %c0_i32 = arith.constant 0 : i32
    %3 = vector.broadcast %c0_i32 : i32 to vector<32x1xi32>
    %4 = arith.cmpi sge, %2, %3 : vector<32x1xi32>
    %c-1_i32_1 = arith.constant -1 : i32
    %5 = vector.broadcast %c-1_i32_1 : i32 to vector<32x1xi32>
    %6 = arith.addi %0, %5 : vector<32x1xi32>
    %c16_i32 = arith.constant 16 : i32
    %7 = vector.broadcast %c16_i32 : i32 to vector<32x1xi32>
    %8 = arith.cmpi slt, %6, %7 : vector<32x1xi32>
    %9 = arith.andi %4, %8 : vector<32x1xi1>
    %10 = arith.extui %9 : vector<32x1xi1> to vector<32x1xi32>
    %11 = arith.sitofp %10 : vector<32x1xi32> to vector<32x1xf32>
    %c1_i32 = arith.constant 1 : i32
    %12 = vector.broadcast %c1_i32 : i32 to vector<32x1xi32>
    %13 = arith.addi %0, %12 : vector<32x1xi32>
    %c0_i32_2 = arith.constant 0 : i32
    %14 = vector.broadcast %c0_i32_2 : i32 to vector<32x1xi32>
    %15 = arith.cmpi sge, %13, %14 : vector<32x1xi32>
    %c1_i32_3 = arith.constant 1 : i32
    %16 = vector.broadcast %c1_i32_3 : i32 to vector<32x1xi32>
    %17 = arith.addi %0, %16 : vector<32x1xi32>
    %c16_i32_4 = arith.constant 16 : i32
    %18 = vector.broadcast %c16_i32_4 : i32 to vector<32x1xi32>
    %19 = arith.cmpi slt, %17, %18 : vector<32x1xi32>
    %20 = arith.andi %15, %19 : vector<32x1xi1>
    %21 = arith.extui %20 : vector<32x1xi1> to vector<32x1xi32>
    %22 = arith.sitofp %21 : vector<32x1xi32> to vector<32x1xf32>
    %cst = arith.constant 0.000000e+00 : f32
    %23 = vector.broadcast %cst : f32 to vector<8x36xf32>
    %c0_5 = arith.constant 0 : index
    %c0_6 = arith.constant 0 : index
    %24 = vector.load %arg8[%c0_5, %c0_6] : memref<48x36xf32, #tpu.memory_space<vmem>>, vector<8x36xf32>
    tpu.vector_store %arg8[%c0_5, %c0_6], %23 {strides = array<i32>} : memref<48x36xf32, #tpu.memory_space<vmem>>, vector<8x36xf32>,
    %cst_7 = arith.constant 0.000000e+00 : f32
    %25 = vector.broadcast %cst_7 : f32 to vector<8x36xf32>
    %c40 = arith.constant 40 : index
    %c0_8 = arith.constant 0 : index
    %26 = vector.load %arg8[%c40, %c0_8] : memref<48x36xf32, #tpu.memory_space<vmem>>, vector<8x36xf32>
    tpu.vector_store %arg8[%c40, %c0_8], %25 {strides = array<i32>} : memref<48x36xf32, #tpu.memory_space<vmem>>, vector<8x36xf32>,
    %c0_9 = arith.constant 0 : index
    %c0_10 = arith.constant 0 : index
    %27 = vector.load %arg1[%c0_9, %c0_10] : memref<32x36xf32, #tpu.memory_space<vmem>>, vector<32x36xf32>
    %c8 = arith.constant 8 : index
    %c0_11 = arith.constant 0 : index
    %28 = vector.load %arg8[%c8, %c0_11] : memref<48x36xf32, #tpu.memory_space<vmem>>, vector<32x36xf32>
    tpu.vector_store %arg8[%c8, %c0_11], %27 {strides = array<i32>} : memref<48x36xf32, #tpu.memory_space<vmem>>, vector<32x36xf32>,
    %cst_12 = arith.constant 0.000000e+00 : f32
    %29 = vector.broadcast %cst_12 : f32 to vector<32x96xf32>
    %c7 = arith.constant 7 : index
    %c0_13 = arith.constant 0 : index
    %30 = vector.load %arg8[%c7, %c0_13] : memref<48x36xf32, #tpu.memory_space<vmem>>, vector<32x36xf32>
    %c0_14 = arith.constant 0 : index
    %c0_15 = arith.constant 0 : index
    %c0_16 = arith.constant 0 : index
    %31 = vector.load %arg4[%c0_14, %c0_15, %c0_16] : memref<3x36x96xf32, #tpu.memory_space<vmem>>, vector<1x36x96xf32>
    %32 = vector.shape_cast %31 : vector<1x36x96xf32> to vector<36x96xf32>
    %cst_17 = arith.constant dense<0.000000e+00> : vector<32x96xf32>
    %33 = tpu.matmul %30, %32, %cst_17 {dimension_numbers = #tpu.dot_dimension_numbers<[1], [0], [0], [1], [0, 0, 1, 1], [], []>} : vector<32x36xf32>, vector<36x96xf32>, vector<32x96xf32> -> vector<32x96xf32>
    %34 = vector.broadcast %11 : vector<32x1xf32> to vector<32x96xf32>
    %35 = arith.mulf %33, %34 : vector<32x96xf32>
    %36 = arith.addf %29, %35 : vector<32x96xf32>
    %c8_18 = arith.constant 8 : index
    %c0_19 = arith.constant 0 : index
    %37 = vector.load %arg8[%c8_18, %c0_19] : memref<48x36xf32, #tpu.memory_space<vmem>>, vector<32x36xf32>
    %c1 = arith.constant 1 : index
    %c0_20 = arith.constant 0 : index
    %c0_21 = arith.constant 0 : index
    %38 = vector.load %arg4[%c1, %c0_20, %c0_21] : memref<3x36x96xf32, #tpu.memory_space<vmem>>, vector<1x36x96xf32>
    %39 = vector.shape_cast %38 : vector<1x36x96xf32> to vector<36x96xf32>
    %cst_22 = arith.constant dense<0.000000e+00> : vector<32x96xf32>
    %40 = tpu.matmul %37, %39, %cst_22 {dimension_numbers = #tpu.dot_dimension_numbers<[1], [0], [0], [1], [0, 0, 1, 1], [], []>} : vector<32x36xf32>, vector<36x96xf32>, vector<32x96xf32> -> vector<32x96xf32>
    %41 = arith.addf %36, %40 : vector<32x96xf32>
    %c9 = arith.constant 9 : index
    %c0_23 = arith.constant 0 : index
    %42 = vector.load %arg8[%c9, %c0_23] : memref<48x36xf32, #tpu.memory_space<vmem>>, vector<32x36xf32>
    %c2 = arith.constant 2 : index
    %c0_24 = arith.constant 0 : index
    %c0_25 = arith.constant 0 : index
    %43 = vector.load %arg4[%c2, %c0_24, %c0_25] : memref<3x36x96xf32, #tpu.memory_space<vmem>>, vector<1x36x96xf32>
    %44 = vector.shape_cast %43 : vector<1x36x96xf32> to vector<36x96xf32>
    %cst_26 = arith.constant dense<0.000000e+00> : vector<32x96xf32>
    %45 = tpu.matmul %42, %44, %cst_26 {dimension_numbers = #tpu.dot_dimension_numbers<[1], [0], [0], [1], [0, 0, 1, 1], [], []>} : vector<32x36xf32>, vector<36x96xf32>, vector<32x96xf32> -> vector<32x96xf32>
    %46 = vector.broadcast %22 : vector<32x1xf32> to vector<32x96xf32>
    %47 = arith.mulf %45, %46 : vector<32x96xf32>
    %48 = arith.addf %41, %47 : vector<32x96xf32>
    %c0_27 = arith.constant 0 : index
    %c0_28 = arith.constant 0 : index
    %49 = vector.load %arg6[%c0_27, %c0_28] : memref<1x96xf32, #tpu.memory_space<vmem>>, vector<1x96xf32>
    %50 = vector.broadcast %49 : vector<1x96xf32> to vector<32x96xf32>
    %51 = arith.addf %48, %50 : vector<32x96xf32>
    %52 = vector.extract_strided_slice %51 {offsets = [0, 0], sizes = [32, 32], strides = [1, 1]} : vector<32x96xf32> to vector<32x32xf32>
    %53 = arith.negf %52 : vector<32x32xf32>
    %54 = math.exp %53 : vector<32x32xf32>
    %cst_29 = arith.constant 1.000000e+00 : f32
    %55 = vector.broadcast %cst_29 : f32 to vector<32x32xf32>
    %56 = arith.addf %55, %54 : vector<32x32xf32>
    %57 = arith.divf %55, %56 : vector<32x32xf32>
    %58 = vector.extract_strided_slice %51 {offsets = [0, 32], sizes = [32, 32], strides = [1, 1]} : vector<32x96xf32> to vector<32x32xf32>
    %59 = arith.negf %58 : vector<32x32xf32>
    %60 = math.exp %59 : vector<32x32xf32>
    %cst_30 = arith.constant 1.000000e+00 : f32
    %61 = vector.broadcast %cst_30 : f32 to vector<32x32xf32>
    %62 = arith.addf %61, %60 : vector<32x32xf32>
    %63 = arith.divf %61, %62 : vector<32x32xf32>
    %64 = vector.extract_strided_slice %51 {offsets = [0, 64], sizes = [32, 32], strides = [1, 1]} : vector<32x96xf32> to vector<32x32xf32>
    %c0_31 = arith.constant 0 : index
    %c0_32 = arith.constant 0 : index
    %65 = vector.load %arg2[%c0_31, %c0_32] : memref<32x32xf32, #tpu.memory_space<vmem>>, vector<32x32xf32>
    %66 = arith.mulf %63, %65 : vector<32x32xf32>
    %cst_33 = arith.constant 0.000000e+00 : f32
    %67 = vector.broadcast %cst_33 : f32 to vector<8x32xf32>
    %c0_34 = arith.constant 0 : index
    %c0_35 = arith.constant 0 : index
    %68 = vector.load %arg9[%c0_34, %c0_35] : memref<48x32xf32, #tpu.memory_space<vmem>>, vector<8x32xf32>
    tpu.vector_store %arg9[%c0_34, %c0_35], %67 {strides = array<i32>} : memref<48x32xf32, #tpu.memory_space<vmem>>, vector<8x32xf32>,
    %cst_36 = arith.constant 0.000000e+00 : f32
    %69 = vector.broadcast %cst_36 : f32 to vector<8x32xf32>
    %c40_37 = arith.constant 40 : index
    %c0_38 = arith.constant 0 : index
    %70 = vector.load %arg9[%c40_37, %c0_38] : memref<48x32xf32, #tpu.memory_space<vmem>>, vector<8x32xf32>
    tpu.vector_store %arg9[%c40_37, %c0_38], %69 {strides = array<i32>} : memref<48x32xf32, #tpu.memory_space<vmem>>, vector<8x32xf32>,
    %c8_39 = arith.constant 8 : index
    %c0_40 = arith.constant 0 : index
    %71 = vector.load %arg9[%c8_39, %c0_40] : memref<48x32xf32, #tpu.memory_space<vmem>>, vector<32x32xf32>
    tpu.vector_store %arg9[%c8_39, %c0_40], %66 {strides = array<i32>} : memref<48x32xf32, #tpu.memory_space<vmem>>, vector<32x32xf32>,
    %c7_41 = arith.constant 7 : index
    %c0_42 = arith.constant 0 : index
    %72 = vector.load %arg9[%c7_41, %c0_42] : memref<48x32xf32, #tpu.memory_space<vmem>>, vector<32x32xf32>
    %c0_43 = arith.constant 0 : index
    %c0_44 = arith.constant 0 : index
    %c0_45 = arith.constant 0 : index
    %73 = vector.load %arg5[%c0_43, %c0_44, %c0_45] : memref<3x32x32xf32, #tpu.memory_space<vmem>>, vector<1x32x32xf32>
    %74 = vector.shape_cast %73 : vector<1x32x32xf32> to vector<32x32xf32>
    %cst_46 = arith.constant dense<0.000000e+00> : vector<32x32xf32>
    %75 = tpu.matmul %72, %74, %cst_46 {dimension_numbers = #tpu.dot_dimension_numbers<[1], [0], [0], [1], [0, 0, 1, 1], [], []>} : vector<32x32xf32>, vector<32x32xf32>, vector<32x32xf32> -> vector<32x32xf32>
    %76 = vector.broadcast %11 : vector<32x1xf32> to vector<32x32xf32>
    %77 = arith.mulf %75, %76 : vector<32x32xf32>
    %78 = arith.addf %64, %77 : vector<32x32xf32>
    %c8_47 = arith.constant 8 : index
    %c0_48 = arith.constant 0 : index
    %79 = vector.load %arg9[%c8_47, %c0_48] : memref<48x32xf32, #tpu.memory_space<vmem>>, vector<32x32xf32>
    %c1_49 = arith.constant 1 : index
    %c0_50 = arith.constant 0 : index
    %c0_51 = arith.constant 0 : index
    %80 = vector.load %arg5[%c1_49, %c0_50, %c0_51] : memref<3x32x32xf32, #tpu.memory_space<vmem>>, vector<1x32x32xf32>
    %81 = vector.shape_cast %80 : vector<1x32x32xf32> to vector<32x32xf32>
    %cst_52 = arith.constant dense<0.000000e+00> : vector<32x32xf32>
    %82 = tpu.matmul %79, %81, %cst_52 {dimension_numbers = #tpu.dot_dimension_numbers<[1], [0], [0], [1], [0, 0, 1, 1], [], []>} : vector<32x32xf32>, vector<32x32xf32>, vector<32x32xf32> -> vector<32x32xf32>
    %83 = arith.addf %78, %82 : vector<32x32xf32>
    %c9_53 = arith.constant 9 : index
    %c0_54 = arith.constant 0 : index
    %84 = vector.load %arg9[%c9_53, %c0_54] : memref<48x32xf32, #tpu.memory_space<vmem>>, vector<32x32xf32>
    %c2_55 = arith.constant 2 : index
    %c0_56 = arith.constant 0 : index
    %c0_57 = arith.constant 0 : index
    %85 = vector.load %arg5[%c2_55, %c0_56, %c0_57] : memref<3x32x32xf32, #tpu.memory_space<vmem>>, vector<1x32x32xf32>
    %86 = vector.shape_cast %85 : vector<1x32x32xf32> to vector<32x32xf32>
    %cst_58 = arith.constant dense<0.000000e+00> : vector<32x32xf32>
    %87 = tpu.matmul %84, %86, %cst_58 {dimension_numbers = #tpu.dot_dimension_numbers<[1], [0], [0], [1], [0, 0, 1, 1], [], []>} : vector<32x32xf32>, vector<32x32xf32>, vector<32x32xf32> -> vector<32x32xf32>
    %88 = vector.broadcast %22 : vector<32x1xf32> to vector<32x32xf32>
    %89 = arith.mulf %87, %88 : vector<32x32xf32>
    %90 = arith.addf %83, %89 : vector<32x32xf32>
    %91 = math.tanh %90 : vector<32x32xf32>
    %92 = arith.mulf %57, %65 : vector<32x32xf32>
    %cst_59 = arith.constant 1.000000e+00 : f32
    %93 = vector.broadcast %cst_59 : f32 to vector<32x32xf32>
    %94 = arith.subf %93, %57 : vector<32x32xf32>
    %95 = arith.mulf %94, %91 : vector<32x32xf32>
    %96 = arith.addf %92, %95 : vector<32x32xf32>
    %c0_60 = arith.constant 0 : index
    %c0_61 = arith.constant 0 : index
    %97 = vector.load %arg7[%c0_60, %c0_61] : memref<32x32xf32, #tpu.memory_space<vmem>>, vector<32x32xf32>
    tpu.vector_store %arg7[%c0_60, %c0_61], %96 {strides = array<i32>} : memref<32x32xf32, #tpu.memory_space<vmem>>, vector<32x32xf32>,
    return
  }
  func.func @transform_0(%arg0: i32) -> (i32, i32) {
    %c0_i32 = arith.constant 0 : i32
    %c0_i32_0 = arith.constant 0 : i32
    return %arg0, %c0_i32 : i32, i32
  }
  func.func @transform_1(%arg0: i32) -> (i32, i32) {
    %c0_i32 = arith.constant 0 : i32
    %c0_i32_0 = arith.constant 0 : i32
    return %arg0, %c0_i32 : i32, i32
  }
  func.func @transform_2(%arg0: i32) -> (i32, i32) {
    %c0_i32 = arith.constant 0 : i32
    %c0_i32_0 = arith.constant 0 : i32
    return %arg0, %c0_i32 : i32, i32
  }
  func.func @transform_3(%arg0: i32) -> (i32, i32, i32) {
    %c0_i32 = arith.constant 0 : i32
    %c0_i32_0 = arith.constant 0 : i32
    %c0_i32_1 = arith.constant 0 : i32
    %c0_i32_2 = arith.constant 0 : i32
    return %c0_i32, %c0_i32_0, %c0_i32_1 : i32, i32, i32
  }
  func.func @transform_4(%arg0: i32) -> (i32, i32, i32) {
    %c0_i32 = arith.constant 0 : i32
    %c0_i32_0 = arith.constant 0 : i32
    %c0_i32_1 = arith.constant 0 : i32
    %c0_i32_2 = arith.constant 0 : i32
    return %c0_i32, %c0_i32_0, %c0_i32_1 : i32, i32, i32
  }
  func.func @transform_5(%arg0: i32) -> (i32, i32) {
    %c0_i32 = arith.constant 0 : i32
    %c0_i32_0 = arith.constant 0 : i32
    %c0_i32_1 = arith.constant 0 : i32
    return %c0_i32, %c0_i32_0 : i32, i32
  }
  func.func @transform_6(%arg0: i32) -> (i32, i32) {
    %c0_i32 = arith.constant 0 : i32
    %c0_i32_0 = arith.constant 0 : i32
    return %arg0, %c0_i32 : i32, i32
  }
}

</mosaic_0001>

<llo_original>
// kernel: tpu_custom_call.1
$region0: #{tpu_custom_call.1}
  #allocation0 [shape = 'u32[]', space=smem, size = 0x4, offset = 0x4, fixed_abs, tag = 'smem constant byte address 0x4 - core index']
  #allocation1 [shape = 'u32[144,128]{1,0:T(1,128)}', space=vmem, size = 0x12000, scoped, tag = 'internal scratch']
  #allocation2 [shape = 'f32[48,36]{1,0:T(8,128)}', space=vmem, size = 0x6000, scoped, tag = 'scratch operand']
  #allocation3 [shape = 'f32[48,32]{1,0:T(8,128)}', space=vmem, size = 0x6000, scoped, tag = 'scratch operand']
  %s0 = inlined_call_operand.vmem [shape: f32[32,36], index: 0, kind: input, shape index: {}]
  %s1 = inlined_call_operand.hbm [shape: f32[32,32], index: 1, kind: input, shape index: {}]
  %s2 = inlined_call_operand.vmem [shape: s32[32,1], index: 2, kind: input, shape index: {}]
  %s3 = inlined_call_operand.hbm [shape: f32[3,36,96], index: 3, kind: input, shape index: {}]
  %s4 = inlined_call_operand.hbm [shape: f32[3,32,32], index: 4, kind: input, shape index: {}]
  %s5 = inlined_call_operand.vmem [shape: f32[1,96], index: 5, kind: input, shape index: {}]
  %s6 = inlined_call_operand.hbm [shape: f32[32,32], index: 6, kind: output, shape index: {}]
  %s7 = sld [smem:[#allocation0]]
  $region46: #{tpu_custom_call.1} parent=0
    _
  %s9 = ssub.s32 1, %s7
  %s10 = scalar_select 0, %s9, %s7
  $region1: #{tpu_custom_call.1} parent=0
    #allocation4 [shape = 'u8[16384]{0}', space=vmem, size = 0x4000, scoped, tag = 'input window, operand 1, single buffered']
    #allocation5 [shape = 's32[1]{0}', space=sflag, size = 0x4, scoped, tag = 'scoped memory for tpu_custom_call.1']
    #allocation6 [shape = 's32[1]{0}', space=sflag, size = 0x4, scoped, tag = 'scoped memory for tpu_custom_call.1']
    #allocation7 [shape = 'u8[61440]{0}', space=vmem, size = 0xf000, scoped, tag = 'input window, operand 3, single buffered']
    #allocation8 [shape = 's32[1]{0}', space=sflag, size = 0x4, scoped, tag = 'scoped memory for tpu_custom_call.1']
    #allocation9 [shape = 'u8[49152]{0}', space=vmem, size = 0xc000, scoped, tag = 'input window, operand 4, single buffered']
    #allocation10 [shape = 'u8[16384]{0}', space=vmem, size = 0x4000, scoped, tag = 'output window, operand 0, single buffered']
    %11 = vsyncpa [#allocation5], 0
    %12 = vsyncpa [#allocation8], 0
    %13 = vsyncpa [#allocation6], 0
    // Predicated region
    $region2: #{tpu_custom_call.1} parent=1 // pred_check
      _
    $region3: #{tpu_custom_call.1} parent=1 // pred_check_branch
      %15 = sbr.rel (0) target = $region5
    $region4: #{tpu_custom_call.1} parent=1 // pred_region
      _
    $region5: #{tpu_custom_call.1} parent=1 // pred_fallthru
      _
    // Predicated region
    $region6: #{tpu_custom_call.1} parent=1 // pred_check
      _
    $region7: #{tpu_custom_call.1} parent=1 // pred_check_branch
      %17 = sbr.rel (0) target = $region9
    $region8: #{tpu_custom_call.1} parent=1 // pred_region
      %s19 = ssub.s32 512, 512
      %20 = vsyncadd [#allocation5], %s19
      %s21 = sshll.u32 [#allocation4], 4
      %s22 = int_to_ptr.vmem [resolvable:$true] %s21
      %27 = dma.hbm_to_vmem [thread:$0]  %s1, 512, %s22, [#allocation5], 128, 128, 8
    $region9: #{tpu_custom_call.1} parent=1 // pred_fallthru
      _
    // Predicated region
    $region10: #{tpu_custom_call.1} parent=1 // pred_check
      _
    $region11: #{tpu_custom_call.1} parent=1 // pred_check_branch
      %29 = sbr.rel (0) target = $region13
    $region12: #{tpu_custom_call.1} parent=1 // pred_region
      _
    $region13: #{tpu_custom_call.1} parent=1 // pred_fallthru
      _
    // Predicated region
    $region14: #{tpu_custom_call.1} parent=1 // pred_check
      _
    $region15: #{tpu_custom_call.1} parent=1 // pred_check_branch
      %31 = sbr.rel (0) target = $region17
    $region16: #{tpu_custom_call.1} parent=1 // pred_region
      %s33 = ssub.s32 1920, 1920
      %34 = vsyncadd [#allocation8], %s33
      %s35 = sshll.u32 [#allocation7], 4
      %s36 = int_to_ptr.vmem [resolvable:$true] %s35
      %41 = dma.hbm_to_vmem [thread:$0]  %s3, 1920, %s36, [#allocation8], 128, 128, 8
    $region17: #{tpu_custom_call.1} parent=1 // pred_fallthru
      _
    // Predicated region
    $region18: #{tpu_custom_call.1} parent=1 // pred_check
      _
    $region19: #{tpu_custom_call.1} parent=1 // pred_check_branch
      %43 = sbr.rel (0) target = $region21
    $region20: #{tpu_custom_call.1} parent=1 // pred_region
      %s45 = ssub.s32 1536, 1536
      %46 = vsyncadd [#allocation8], %s45
      %s47 = sshll.u32 [#allocation9], 4
      %s48 = int_to_ptr.vmem [resolvable:$true] %s47
      %53 = dma.hbm_to_vmem [thread:$0]  %s4, 1536, %s48, [#allocation8], 128, 128, 8
    $region21: #{tpu_custom_call.1} parent=1 // pred_fallthru
      _
    // Predicated region
    $region22: #{tpu_custom_call.1} parent=1 // pred_check
      _
    $region23: #{tpu_custom_call.1} parent=1 // pred_check_branch
      %55 = sbr.rel (0) target = $region25
    $region24: #{tpu_custom_call.1} parent=1 // pred_region
      _
    $region25: #{tpu_custom_call.1} parent=1 // pred_fallthru
      _
    // Predicated region
    $region26: #{tpu_custom_call.1} parent=1 // pred_check
      _
    $region27: #{tpu_custom_call.1} parent=1 // pred_check_branch
      %57 = sbr.rel (0) target = $region29
    $region28: #{tpu_custom_call.1} parent=1 // pred_region
      %58 = dma.done [#allocation5], 512
    $region29: #{tpu_custom_call.1} parent=1 // pred_fallthru
      _
    // Predicated region
    $region30: #{tpu_custom_call.1} parent=1 // pred_check
      _
    $region31: #{tpu_custom_call.1} parent=1 // pred_check_branch
      %60 = sbr.rel (0) target = $region33
    $region32: #{tpu_custom_call.1} parent=1 // pred_region
      %61 = dma.done [#allocation8], 1920
    $region33: #{tpu_custom_call.1} parent=1 // pred_fallthru
      _
    // Predicated region
    $region34: #{tpu_custom_call.1} parent=1 // pred_check
      _
    $region35: #{tpu_custom_call.1} parent=1 // pred_check_branch
      %63 = sbr.rel (0) target = $region37
    $region36: #{tpu_custom_call.1} parent=1 // pred_region
      %64 = dma.done [#allocation8], 1536
    $region37: #{tpu_custom_call.1} parent=1 // pred_fallthru
      _
    %v65 = vld [vmem:[%s2] sm:$0xff]
    %v66 = vld [vmem:[%s2 + $0x8] sm:$0xff]
    %v67 = vld [vmem:[%s2 + $0x10] sm:$0xff]
    %v68 = vld [vmem:[%s2 + $0x18] sm:$0xff]
    %v69 = vadd.s32 %v65, 4294967295
    %v70 = vadd.s32 %v66, 4294967295
    %v71 = vadd.s32 %v67, 4294967295
    %v72 = vadd.s32 %v68, 4294967295
    %vm73 = vcmp.ge.s32.totalorder %v69, 0
    %vm74 = vcmp.ge.s32.totalorder %v70, 0
    %vm75 = vcmp.ge.s32.totalorder %v71, 0
    %vm76 = vcmp.ge.s32.totalorder %v72, 0
    %vm77 = vcmp.lt.s32.totalorder %v69, 16
    %vm78 = vcmp.lt.s32.totalorder %v70, 16
    %vm79 = vcmp.lt.s32.totalorder %v71, 16
    %vm80 = vcmp.lt.s32.totalorder %v72, 16
    %vm81 = vmand %vm73, %vm77
    %vm82 = vmand %vm74, %vm78
    %vm83 = vmand %vm75, %vm79
    %vm84 = vmand %vm76, %vm80
    %v85 = vsel %vm81, 1, 0
    %v86 = vsel %vm82, 1, 0
    %v87 = vsel %vm83, 1, 0
    %v88 = vsel %vm84, 1, 0
    %v89 = vcvt.s32.f32 %v85
    %v90 = vcvt.s32.f32 %v86
    %v91 = vcvt.s32.f32 %v87
    %v92 = vcvt.s32.f32 %v88
    %v93 = vadd.s32 %v65, 1
    %v94 = vadd.s32 %v66, 1
    %v95 = vadd.s32 %v67, 1
    %v96 = vadd.s32 %v68, 1
    %vm97 = vcmp.ge.s32.totalorder %v93, 0
    %vm98 = vcmp.ge.s32.totalorder %v94, 0
    %vm99 = vcmp.ge.s32.totalorder %v95, 0
    %vm100 = vcmp.ge.s32.totalorder %v96, 0
    %vm101 = vcmp.lt.s32.totalorder %v93, 16
    %vm102 = vcmp.lt.s32.totalorder %v94, 16
    %vm103 = vcmp.lt.s32.totalorder %v95, 16
    %vm104 = vcmp.lt.s32.totalorder %v96, 16
    %vm105 = vmand %vm97, %vm101
    %vm106 = vmand %vm98, %vm102
    %vm107 = vmand %vm99, %vm103
    %vm108 = vmand %vm100, %vm104
    %v109 = vsel %vm105, 1, 0
    %v110 = vsel %vm106, 1, 0
    %v111 = vsel %vm107, 1, 0
    %v112 = vsel %vm108, 1, 0
    %v113 = vcvt.s32.f32 %v109
    %v114 = vcvt.s32.f32 %v110
    %v115 = vcvt.s32.f32 %v111
    %v116 = vcvt.s32.f32 %v112
    %vm117 = vcmask 293888
    %118 = vst.msk [vmem:[#allocation2] sm:$0xff] %vm117, 0.0
    %119 = vst.msk [vmem:[#allocation2 + $0x28] sm:$0xff] %vm117, 0.0
    %v120 = vld [vmem:[%s0] sm:$0xff]
    %v121 = vld [vmem:[%s0 + $0x8] sm:$0xff]
    %v122 = vld [vmem:[%s0 + $0x10] sm:$0xff]
    %v123 = vld [vmem:[%s0 + $0x18] sm:$0xff]
    %124 = vst.msk [vmem:[#allocation2 + $0x8] sm:$0xff] %vm117, %v120
    %125 = vst.msk [vmem:[#allocation2 + $0x10] sm:$0xff] %vm117, %v121
    %126 = vst.msk [vmem:[#allocation2 + $0x18] sm:$0xff] %vm117, %v122
    %127 = vst.msk [vmem:[#allocation2 + $0x20] sm:$0xff] %vm117, %v123
    %v128 = vld [vmem:[#allocation2 + $0x7] sm:$0xff]
    %v129 = vld [vmem:[#allocation2 + $0xf] sm:$0xff]
    %v130 = vld [vmem:[#allocation2 + $0x17] sm:$0xff]
    %v131 = vld [vmem:[#allocation2 + $0x1f] sm:$0xff]
    %v132 = vld [vmem:[#allocation7] sm:$0xff]
    %v133 = vld [vmem:[#allocation7 + $0x8] sm:$0xff]
    %v134 = vld [vmem:[#allocation7 + $0x10] sm:$0xff]
    %v135 = vld [vmem:[#allocation7 + $0x18] sm:$0xff]
    %v136 = vld [vmem:[#allocation7 + $0x20] sm:$0xf]
    %v138 = vsel %vm117, %v128, 0
    %v141 = vsel %vm117, %v129, 0
    %v144 = vsel %vm117, %v130, 0
    %v147 = vsel %vm117, %v131, 0
    %vm149 = vcmask 1043456
    %v151 = vsel %vm149, %v136, 0
    %153 = vmatprep.subr.mxu0 0.0
    %154 = vmatpush1.msra.mxu0 %v132
    %155 = vmatprep.subr.mxu0 0.0
    %156 = vmatpush1.msra.mxu0 %v133
    %157 = vmatprep.subr.mxu0 0.0
    %158 = vmatpush1.msra.mxu0 %v134
    %159 = vmatprep.subr.mxu0 0.0
    %160 = vmatpush1.msra.mxu0 %v135
    %161 = vmatprep.subr.mxu0 0.0
    %162 = vmatpush1.msra.mxu0 %v151
    %163 = vmatprep.subr.mxu0 0.0
    %164 = vmatpush1.msra.mxu0 0.0
    %165 = vmatprep.subr.mxu0 0.0
    %166 = vmatpush1.msra.mxu0 0.0
    %167 = vmatprep.subr.mxu0 0.0
    %168 = vmatpush1.msra.mxu0 0.0
    %169 = vmatprep.subr.mxu0 0.0
    %170 = vmatpush1.msra.mxu0 0.0
    %171 = vmatprep.subr.mxu0 0.0
    %172 = vmatpush1.msra.mxu0 0.0
    %173 = vmatprep.subr.mxu0 0.0
    %174 = vmatpush1.msra.mxu0 0.0
    %175 = vmatprep.subr.mxu0 0.0
    %176 = vmatpush1.msra.mxu0 0.0
    %177 = vmatprep.subr.mxu0 0.0
    %178 = vmatpush1.msra.mxu0 0.0
    %179 = vmatprep.subr.mxu0 0.0
    %180 = vmatpush1.msra.mxu0 0.0
    %181 = vmatprep.subr.mxu0 0.0
    %182 = vmatpush1.msra.mxu0 0.0
    %183 = vmatprep.subr.mxu0 0.0
    %184 = vmatpush1.msra.mxu0 0.0
    %185 = vmatprep.subr.mxu0 0.0
    %186 = vmatpush1.msra.mxu0 0.0
    %187 = vmatprep.subr.mxu0 0.0
    %188 = vmatpush1.msra.mxu0 0.0
    %189 = vmatprep.subr.mxu0 0.0
    %190 = vmatpush1.msra.mxu0 0.0
    %191 = vmatprep.subr.mxu0 0.0
    %192 = vmatpush1.msra.mxu0 0.0
    %193 = vmatprep.subr.mxu0 0.0
    %194 = vmatpush1.msra.mxu0 0.0
    %195 = vmatprep.subr.mxu0 0.0
    %196 = vmatpush1.msra.mxu0 0.0
    %197 = vmatprep.subr.mxu0 0.0
    %198 = vmatpush1.msra.mxu0 0.0
    %199 = vmatprep.subr.mxu0 0.0
    %200 = vmatpush1.msra.mxu0 0.0
    %201 = vmatprep.subr.mxu0 0.0
    %202 = vmatpush1.msra.mxu0 0.0
    %203 = vmatprep.subr.mxu0 0.0
    %204 = vmatpush1.msra.mxu0 0.0
    %205 = vmatprep.subr.mxu0 0.0
    %206 = vmatpush1.msra.mxu0 0.0
    %207 = vmatprep.subr.mxu0 0.0
    %208 = vmatpush1.msra.mxu0 0.0
    %209 = vmatprep.subr.mxu0 0.0
    %210 = vmatpush1.msra.mxu0 0.0
    %211 = vmatprep.subr.mxu0 0.0
    %212 = vmatpush1.msra.mxu0 0.0
    %213 = vmatprep.subr.mxu0 0.0
    %214 = vmatpush1.msra.mxu0 0.0
    %215 = vmatprep.subr.mxu0 0.0
    %216 = vmatpush1.msra.mxu0 0.0
    %217 = vmatprep.mubr.f32.mxu0 0.0
    %218 = vmatmul.mubr.f32.gmra.mrb[0].mxu0 %v138
    %v219 = vpop.f32.mrb[0].mxu0
    %v220 = vadd.f32 0.0, %v219
    %v221 = vpop.f32.mrb[0].mxu0
    %222 = vmatprep.mubr.f32.mxu0 0.0
    %223 = vmatmul.mubr.f32.gmra.mrb[0].mxu0 %v141
    %v224 = vpop.f32.mrb[0].mxu0
    %v225 = vadd.f32 0.0, %v224
    %v226 = vpop.f32.mrb[0].mxu0
    %227 = vmatprep.mubr.f32.mxu0 0.0
    %228 = vmatmul.mubr.f32.gmra.mrb[0].mxu0 %v144
    %v229 = vpop.f32.mrb[0].mxu0
    %v230 = vadd.f32 0.0, %v229
    %v231 = vpop.f32.mrb[0].mxu0
    %232 = vmatprep.mubr.f32.mxu0 0.0
    %233 = vmatmul.mubr.f32.gmra.mrb[0].mxu0 %v147
    %v234 = vpop.f32.mrb[0].mxu0
    %v235 = vadd.f32 0.0, %v234
    %v236 = vpop.f32.mrb[0].mxu0
    %237 = vdwg.mxu0
    %239 = vset.pattern.permute.xlu0 0
    %240 = vperm.xlu0 %239, %v89
    %v241 = vpop.permute.xlu0 %240
    %244 = vset.pattern.permute.xlu0 0
    %245 = vperm.xlu0 %244, %v90
    %v246 = vpop.permute.xlu0 %245
    %249 = vset.pattern.permute.xlu0 0
    %250 = vperm.xlu0 %249, %v91
    %v251 = vpop.permute.xlu0 %250
    %254 = vset.pattern.permute.xlu0 0
    %255 = vperm.xlu0 %254, %v92
    %v256 = vpop.permute.xlu0 %255
    %v258 = vmul.f32 %v220, %v241
    %v259 = vmul.f32 %v225, %v246
    %v260 = vmul.f32 %v230, %v251
    %v261 = vmul.f32 %v235, %v256
    %v262 = vadd.f32 %v258, 0.0
    %v263 = vadd.f32 %v259, 0.0
    %v264 = vadd.f32 %v260, 0.0
    %v265 = vadd.f32 %v261, 0.0
    %v266 = vld [vmem:[#allocation2 + $0x8] sm:$0xff]
    %v267 = vld [vmem:[#allocation2 + $0x10] sm:$0xff]
    %v268 = vld [vmem:[#allocation2 + $0x18] sm:$0xff]
    %v269 = vld [vmem:[#allocation2 + $0x20] sm:$0xff]
    %s270 = scalar_lea.vmem [#allocation7], 40
    %v271 = vld [vmem:[%s270] sm:$0xff]
    %v272 = vld [vmem:[%s270 + $0x8] sm:$0xff]
    %v273 = vld [vmem:[%s270 + $0x10] sm:$0xff]
    %v274 = vld [vmem:[%s270 + $0x18] sm:$0xff]
    %v275 = vld [vmem:[%s270 + $0x20] sm:$0xf]
    %v277 = vsel %vm117, %v266, 0
    %v280 = vsel %vm117, %v267, 0
    %v283 = vsel %vm117, %v268, 0
    %v286 = vsel %vm117, %v269, 0
    %v289 = vsel %vm149, %v275, 0
    %291 = vmatprep.subr.mxu0 0.0
    %292 = vmatpush1.msra.mxu0 %v271
    %293 = vmatprep.subr.mxu0 0.0
    %294 = vmatpush1.msra.mxu0 %v272
    %295 = vmatprep.subr.mxu0 0.0
    %296 = vmatpush1.msra.mxu0 %v273
    %297 = vmatprep.subr.mxu0 0.0
    %298 = vmatpush1.msra.mxu0 %v274
    %299 = vmatprep.subr.mxu0 0.0
    %300 = vmatpush1.msra.mxu0 %v289
    %301 = vmatprep.subr.mxu0 0.0
    %302 = vmatpush1.msra.mxu0 0.0
    %303 = vmatprep.subr.mxu0 0.0
    %304 = vmatpush1.msra.mxu0 0.0
    %305 = vmatprep.subr.mxu0 0.0
    %306 = vmatpush1.msra.mxu0 0.0
    %307 = vmatprep.subr.mxu0 0.0
    %308 = vmatpush1.msra.mxu0 0.0
    %309 = vmatprep.subr.mxu0 0.0
    %310 = vmatpush1.msra.mxu0 0.0
    %311 = vmatprep.subr.mxu0 0.0
    %312 = vmatpush1.msra.mxu0 0.0
    %313 = vmatprep.subr.mxu0 0.0
    %314 = vmatpush1.msra.mxu0 0.0
    %315 = vmatprep.subr.mxu0 0.0
    %316 = vmatpush1.msra.mxu0 0.0
    %317 = vmatprep.subr.mxu0 0.0
    %318 = vmatpush1.msra.mxu0 0.0
    %319 = vmatprep.subr.mxu0 0.0
    %320 = vmatpush1.msra.mxu0 0.0
    %321 = vmatprep.subr.mxu0 0.0
    %322 = vmatpush1.msra.mxu0 0.0
    %323 = vmatprep.subr.mxu0 0.0
    %324 = vmatpush1.msra.mxu0 0.0
    %325 = vmatprep.subr.mxu0 0.0
    %326 = vmatpush1.msra.mxu0 0.0
    %327 = vmatprep.subr.mxu0 0.0
    %328 = vmatpush1.msra.mxu0 0.0
    %329 = vmatprep.subr.mxu0 0.0
    %330 = vmatpush1.msra.mxu0 0.0
    %331 = vmatprep.subr.mxu0 0.0
    %332 = vmatpush1.msra.mxu0 0.0
    %333 = vmatprep.subr.mxu0 0.0
    %334 = vmatpush1.msra.mxu0 0.0
    %335 = vmatprep.subr.mxu0 0.0
    %336 = vmatpush1.msra.mxu0 0.0
    %337 = vmatprep.subr.mxu0 0.0
    %338 = vmatpush1.msra.mxu0 0.0
    %339 = vmatprep.subr.mxu0 0.0
    %340 = vmatpush1.msra.mxu0 0.0
    %341 = vmatprep.subr.mxu0 0.0
    %342 = vmatpush1.msra.mxu0 0.0
    %343 = vmatprep.subr.mxu0 0.0
    %344 = vmatpush1.msra.mxu0 0.0
    %345 = vmatprep.subr.mxu0 0.0
    %346 = vmatpush1.msra.mxu0 0.0
    %347 = vmatprep.subr.mxu0 0.0
    %348 = vmatpush1.msra.mxu0 0.0
    %349 = vmatprep.subr.mxu0 0.0
    %350 = vmatpush1.msra.mxu0 0.0
    %351 = vmatprep.subr.mxu0 0.0
    %352 = vmatpush1.msra.mxu0 0.0
    %353 = vmatprep.subr.mxu0 0.0
    %354 = vmatpush1.msra.mxu0 0.0
    %355 = vmatprep.mubr.f32.mxu0 0.0
    %356 = vmatmul.mubr.f32.gmra.mrb[0].mxu0 %v277
    %v357 = vpop.f32.mrb[0].mxu0
    %v358 = vadd.f32 0.0, %v357
    %v359 = vpop.f32.mrb[0].mxu0
    %360 = vmatprep.mubr.f32.mxu0 0.0
    %361 = vmatmul.mubr.f32.gmra.mrb[0].mxu0 %v280
    %v362 = vpop.f32.mrb[0].mxu0
    %v363 = vadd.f32 0.0, %v362
    %v364 = vpop.f32.mrb[0].mxu0
    %365 = vmatprep.mubr.f32.mxu0 0.0
    %366 = vmatmul.mubr.f32.gmra.mrb[0].mxu0 %v283
    %v367 = vpop.f32.mrb[0].mxu0
    %v368 = vadd.f32 0.0, %v367
    %v369 = vpop.f32.mrb[0].mxu0
    %370 = vmatprep.mubr.f32.mxu0 0.0
    %371 = vmatmul.mubr.f32.gmra.mrb[0].mxu0 %v286
    %v372 = vpop.f32.mrb[0].mxu0
    %v373 = vadd.f32 0.0, %v372
    %v374 = vpop.f32.mrb[0].mxu0
    %375 = vdwg.mxu0
    %v376 = vadd.f32 %v262, %v358
    %v377 = vadd.f32 %v263, %v363
    %v378 = vadd.f32 %v264, %v368
    %v379 = vadd.f32 %v265, %v373
    %v380 = vld [vmem:[#allocation2 + $0x9] sm:$0xff]
    %v381 = vld [vmem:[#allocation2 + $0x11] sm:$0xff]
    %v382 = vld [vmem:[#allocation2 + $0x19] sm:$0xff]
    %v383 = vld [vmem:[#allocation2 + $0x21] sm:$0xff]
    %s384 = scalar_lea.vmem [#allocation7], 80
    %v385 = vld [vmem:[%s384] sm:$0xff]
    %v386 = vld [vmem:[%s384 + $0x8] sm:$0xff]
    %v387 = vld [vmem:[%s384 + $0x10] sm:$0xff]
    %v388 = vld [vmem:[%s384 + $0x18] sm:$0xff]
    %v389 = vld [vmem:[%s384 + $0x20] sm:$0xf]
    %v391 = vsel %vm117, %v380, 0
    %v394 = vsel %vm117, %v381, 0
    %v397 = vsel %vm117, %v382, 0
    %v400 = vsel %vm117, %v383, 0
    %v403 = vsel %vm149, %v389, 0
    %405 = vmatprep.subr.mxu0 0.0
    %406 = vmatpush1.msra.mxu0 %v385
    %407 = vmatprep.subr.mxu0 0.0
    %408 = vmatpush1.msra.mxu0 %v386
    %409 = vmatprep.subr.mxu0 0.0
    %410 = vmatpush1.msra.mxu0 %v387
    %411 = vmatprep.subr.mxu0 0.0
    %412 = vmatpush1.msra.mxu0 %v388
    %413 = vmatprep.subr.mxu0 0.0
    %414 = vmatpush1.msra.mxu0 %v403
    %415 = vmatprep.subr.mxu0 0.0
    %416 = vmatpush1.msra.mxu0 0.0
    %417 = vmatprep.subr.mxu0 0.0
    %418 = vmatpush1.msra.mxu0 0.0
    %419 = vmatprep.subr.mxu0 0.0
    %420 = vmatpush1.msra.mxu0 0.0
    %421 = vmatprep.subr.mxu0 0.0
    %422 = vmatpush1.msra.mxu0 0.0
    %423 = vmatprep.subr.mxu0 0.0
    %424 = vmatpush1.msra.mxu0 0.0
    %425 = vmatprep.subr.mxu0 0.0
    %426 = vmatpush1.msra.mxu0 0.0
    %427 = vmatprep.subr.mxu0 0.0
    %428 = vmatpush1.msra.mxu0 0.0
    %429 = vmatprep.subr.mxu0 0.0
    %430 = vmatpush1.msra.mxu0 0.0
    %431 = vmatprep.subr.mxu0 0.0
    %432 = vmatpush1.msra.mxu0 0.0
    %433 = vmatprep.subr.mxu0 0.0
    %434 = vmatpush1.msra.mxu0 0.0
    %435 = vmatprep.subr.mxu0 0.0
    %436 = vmatpush1.msra.mxu0 0.0
    %437 = vmatprep.subr.mxu0 0.0
    %438 = vmatpush1.msra.mxu0 0.0
    %439 = vmatprep.subr.mxu0 0.0
    %440 = vmatpush1.msra.mxu0 0.0
    %441 = vmatprep.subr.mxu0 0.0
    %442 = vmatpush1.msra.mxu0 0.0
    %443 = vmatprep.subr.mxu0 0.0
    %444 = vmatpush1.msra.mxu0 0.0
    %445 = vmatprep.subr.mxu0 0.0
    %446 = vmatpush1.msra.mxu0 0.0
    %447 = vmatprep.subr.mxu0 0.0
    %448 = vmatpush1.msra.mxu0 0.0
    %449 = vmatprep.subr.mxu0 0.0
    %450 = vmatpush1.msra.mxu0 0.0
    %451 = vmatprep.subr.mxu0 0.0
    %452 = vmatpush1.msra.mxu0 0.0
    %453 = vmatprep.subr.mxu0 0.0
    %454 = vmatpush1.msra.mxu0 0.0
    %455 = vmatprep.subr.mxu0 0.0
    %456 = vmatpush1.msra.mxu0 0.0
    %457 = vmatprep.subr.mxu0 0.0
    %458 = vmatpush1.msra.mxu0 0.0
    %459 = vmatprep.subr.mxu0 0.0
    %460 = vmatpush1.msra.mxu0 0.0
    %461 = vmatprep.subr.mxu0 0.0
    %462 = vmatpush1.msra.mxu0 0.0
    %463 = vmatprep.subr.mxu0 0.0
    %464 = vmatpush1.msra.mxu0 0.0
    %465 = vmatprep.subr.mxu0 0.0
    %466 = vmatpush1.msra.mxu0 0.0
    %467 = vmatprep.subr.mxu0 0.0
    %468 = vmatpush1.msra.mxu0 0.0
    %469 = vmatprep.mubr.f32.mxu0 0.0
    %470 = vmatmul.mubr.f32.gmra.mrb[0].mxu0 %v391
    %v471 = vpop.f32.mrb[0].mxu0
    %v472 = vadd.f32 0.0, %v471
    %v473 = vpop.f32.mrb[0].mxu0
    %474 = vmatprep.mubr.f32.mxu0 0.0
    %475 = vmatmul.mubr.f32.gmra.mrb[0].mxu0 %v394
    %v476 = vpop.f32.mrb[0].mxu0
    %v477 = vadd.f32 0.0, %v476
    %v478 = vpop.f32.mrb[0].mxu0
    %479 = vmatprep.mubr.f32.mxu0 0.0
    %480 = vmatmul.mubr.f32.gmra.mrb[0].mxu0 %v397
    %v481 = vpop.f32.mrb[0].mxu0
    %v482 = vadd.f32 0.0, %v481
    %v483 = vpop.f32.mrb[0].mxu0
    %484 = vmatprep.mubr.f32.mxu0 0.0
    %485 = vmatmul.mubr.f32.gmra.mrb[0].mxu0 %v400
    %v486 = vpop.f32.mrb[0].mxu0
    %v487 = vadd.f32 0.0, %v486
    %v488 = vpop.f32.mrb[0].mxu0
    %489 = vdwg.mxu0
    %491 = vset.pattern.permute.xlu0 0
    %492 = vperm.xlu0 %491, %v113
    %v493 = vpop.permute.xlu0 %492
    %496 = vset.pattern.permute.xlu0 0
    %497 = vperm.xlu0 %496, %v114
    %v498 = vpop.permute.xlu0 %497
    %501 = vset.pattern.permute.xlu0 0
    %502 = vperm.xlu0 %501, %v115
    %v503 = vpop.permute.xlu0 %502
    %506 = vset.pattern.permute.xlu0 0
    %507 = vperm.xlu0 %506, %v116
    %v508 = vpop.permute.xlu0 %507
    %v510 = vmul.f32 %v472, %v493
    %v511 = vmul.f32 %v477, %v498
    %v512 = vmul.f32 %v482, %v503
    %v513 = vmul.f32 %v487, %v508
    %v514 = vadd.f32 %v376, %v510
    %v515 = vadd.f32 %v377, %v511
    %v516 = vadd.f32 %v378, %v512
    %v517 = vadd.f32 %v379, %v513
    %v518 = vld [vmem:[%s5] sm:$0x1]
    %v520 = vlaneseq
    %v521 = vshrl.u32 %v520, 7
    %v522 = vsub.s32 0, %v521
    %v523 = vrot.slane %v518, %v522
    %v525 = vadd.f32 %v514, %v523
    %v526 = vadd.f32 %v515, %v523
    %v527 = vadd.f32 %v516, %v523
    %v528 = vadd.f32 %v517, %v523
    %v529 = vxor.u32 %v525, 2147483648
    %v530 = vxor.u32 %v526, 2147483648
    %v531 = vxor.u32 %v527, 2147483648
    %v532 = vxor.u32 %v528, 2147483648
    %v533 = vmul.f32 %v529, 1.442695
    %v534 = vpow.pop %v533
    %v535 = vmul.f32 %v530, 1.442695
    %v536 = vpow.pop %v535
    %v537 = vmul.f32 %v531, 1.442695
    %v538 = vpow.pop %v537
    %v539 = vmul.f32 %v532, 1.442695
    %v540 = vpow.pop %v539
    %v541 = vadd.f32 %v534, 1.0
    %v542 = vadd.f32 %v536, 1.0
    %v543 = vadd.f32 %v538, 1.0
    %v544 = vadd.f32 %v540, 1.0
    %v545 = vrcp.pop %v541
    %v546 = vmul.f32 1.0, %v545
    %v547 = vrcp.pop %v542
    %v548 = vmul.f32 1.0, %v547
    %v549 = vrcp.pop %v543
    %v550 = vmul.f32 1.0, %v549
    %v551 = vrcp.pop %v544
    %v552 = vmul.f32 1.0, %v551
    %v553 = vld [vmem:[#allocation4] sm:$0xff]
    %v554 = vld [vmem:[#allocation4 + $0x8] sm:$0xff]
    %v555 = vld [vmem:[#allocation4 + $0x10] sm:$0xff]
    %v556 = vld [vmem:[#allocation4 + $0x18] sm:$0xff]
    %561 = vrot.lane.b32.xlu0 %v553, 32
    %v562 = vpop.permute.xlu0 %561
    %563 = vrot.lane.b32.xlu0 %v554, 32
    %v564 = vpop.permute.xlu0 %563
    %565 = vrot.lane.b32.xlu0 %v555, 32
    %v566 = vpop.permute.xlu0 %565
    %567 = vrot.lane.b32.xlu0 %v556, 32
    %v568 = vpop.permute.xlu0 %567
    %v573 = vmul.f32 %v546, %v562
    %v574 = vmul.f32 %v548, %v564
    %v575 = vmul.f32 %v550, %v566
    %v576 = vmul.f32 %v552, %v568
    %vm577 = vcmask 261120
    %578 = vst.msk [vmem:[#allocation3] sm:$0xff] %vm577, 0.0
    %579 = vst.msk [vmem:[#allocation3 + $0x28] sm:$0xff] %vm577, 0.0
    %584 = vrot.lane.b32.xlu0 %v573, 96
    %v585 = vpop.permute.xlu0 %584
    %586 = vrot.lane.b32.xlu0 %v574, 96
    %v587 = vpop.permute.xlu0 %586
    %588 = vrot.lane.b32.xlu0 %v575, 96
    %v589 = vpop.permute.xlu0 %588
    %590 = vrot.lane.b32.xlu0 %v576, 96
    %v591 = vpop.permute.xlu0 %590
    %596 = vst.msk [vmem:[#allocation3 + $0x8] sm:$0xff] %vm577, %v585
    %597 = vst.msk [vmem:[#allocation3 + $0x10] sm:$0xff] %vm577, %v587
    %598 = vst.msk [vmem:[#allocation3 + $0x18] sm:$0xff] %vm577, %v589
    %599 = vst.msk [vmem:[#allocation3 + $0x20] sm:$0xff] %vm577, %v591
    %v600 = vld [vmem:[#allocation3 + $0x7] sm:$0xff]
    %v601 = vld [vmem:[#allocation3 + $0xf] sm:$0xff]
    %v602 = vld [vmem:[#allocation3 + $0x17] sm:$0xff]
    %v603 = vld [vmem:[#allocation3 + $0x1f] sm:$0xff]
    %v604 = vld [vmem:[#allocation9] sm:$0xff]
    %v605 = vld [vmem:[#allocation9 + $0x8] sm:$0xff]
    %v606 = vld [vmem:[#allocation9 + $0x10] sm:$0xff]
    %v607 = vld [vmem:[#allocation9 + $0x18] sm:$0xff]
    %v609 = vsel %vm577, %v600, 0
    %v612 = vsel %vm577, %v601, 0
    %v615 = vsel %vm577, %v602, 0
    %v618 = vsel %vm577, %v603, 0
    %620 = vmatprep.subr.mxu0 0.0
    %621 = vmatpush1.msra.mxu0 %v604
    %622 = vmatprep.subr.mxu0 0.0
    %623 = vmatpush1.msra.mxu0 %v605
    %624 = vmatprep.subr.mxu0 0.0
    %625 = vmatpush1.msra.mxu0 %v606
    %626 = vmatprep.subr.mxu0 0.0
    %627 = vmatpush1.msra.mxu0 %v607
    %628 = vmatprep.subr.mxu0 0.0
    %629 = vmatpush1.msra.mxu0 0.0
    %630 = vmatprep.subr.mxu0 0.0
    %631 = vmatpush1.msra.mxu0 0.0
    %632 = vmatprep.subr.mxu0 0.0
    %633 = vmatpush1.msra.mxu0 0.0
    %634 = vmatprep.subr.mxu0 0.0
    %635 = vmatpush1.msra.mxu0 0.0
    %636 = vmatprep.subr.mxu0 0.0
    %637 = vmatpush1.msra.mxu0 0.0
    %638 = vmatprep.subr.mxu0 0.0
    %639 = vmatpush1.msra.mxu0 0.0
    %640 = vmatprep.subr.mxu0 0.0
    %641 = vmatpush1.msra.mxu0 0.0
    %642 = vmatprep.subr.mxu0 0.0
    %643 = vmatpush1.msra.mxu0 0.0
    %644 = vmatprep.subr.mxu0 0.0
    %645 = vmatpush1.msra.mxu0 0.0
    %646 = vmatprep.subr.mxu0 0.0
    %647 = vmatpush1.msra.mxu0 0.0
    %648 = vmatprep.subr.mxu0 0.0
    %649 = vmatpush1.msra.mxu0 0.0
    %650 = vmatprep.subr.mxu0 0.0
    %651 = vmatpush1.msra.mxu0 0.0
    %652 = vmatprep.subr.mxu0 0.0
    %653 = vmatpush1.msra.mxu0 0.0
    %654 = vmatprep.subr.mxu0 0.0
    %655 = vmatpush1.msra.mxu0 0.0
    %656 = vmatprep.subr.mxu0 0.0
    %657 = vmatpush1.msra.mxu0 0.0
    %658 = vmatprep.subr.mxu0 0.0
    %659 = vmatpush1.msra.mxu0 0.0
    %660 = vmatprep.subr.mxu0 0.0
    %661 = vmatpush1.msra.mxu0 0.0
    %662 = vmatprep.subr.mxu0 0.0
    %663 = vmatpush1.msra.mxu0 0.0
    %664 = vmatprep.subr.mxu0 0.0
    %665 = vmatpush1.msra.mxu0 0.0
    %666 = vmatprep.subr.mxu0 0.0
    %667 = vmatpush1.msra.mxu0 0.0
    %668 = vmatprep.subr.mxu0 0.0
    %669 = vmatpush1.msra.mxu0 0.0
    %670 = vmatprep.subr.mxu0 0.0
    %671 = vmatpush1.msra.mxu0 0.0
    %672 = vmatprep.subr.mxu0 0.0
    %673 = vmatpush1.msra.mxu0 0.0
    %674 = vmatprep.subr.mxu0 0.0
    %675 = vmatpush1.msra.mxu0 0.0
    %676 = vmatprep.subr.mxu0 0.0
    %677 = vmatpush1.msra.mxu0 0.0
    %678 = vmatprep.subr.mxu0 0.0
    %679 = vmatpush1.msra.mxu0 0.0
    %680 = vmatprep.subr.mxu0 0.0
    %681 = vmatpush1.msra.mxu0 0.0
    %682 = vmatprep.subr.mxu0 0.0
    %683 = vmatpush1.msra.mxu0 0.0
    %684 = vmatprep.mubr.f32.mxu0 0.0
    %685 = vmatmul.mubr.f32.gmra.mrb[0].mxu0 %v609
    %v686 = vpop.f32.mrb[0].mxu0
    %v687 = vadd.f32 0.0, %v686
    %v688 = vpop.f32.mrb[0].mxu0
    %689 = vmatprep.mubr.f32.mxu0 0.0
    %690 = vmatmul.mubr.f32.gmra.mrb[0].mxu0 %v612
    %v691 = vpop.f32.mrb[0].mxu0
    %v692 = vadd.f32 0.0, %v691
    %v693 = vpop.f32.mrb[0].mxu0
    %694 = vmatprep.mubr.f32.mxu0 0.0
    %695 = vmatmul.mubr.f32.gmra.mrb[0].mxu0 %v615
    %v696 = vpop.f32.mrb[0].mxu0
    %v697 = vadd.f32 0.0, %v696
    %v698 = vpop.f32.mrb[0].mxu0
    %699 = vmatprep.mubr.f32.mxu0 0.0
    %700 = vmatmul.mubr.f32.gmra.mrb[0].mxu0 %v618
    %v701 = vpop.f32.mrb[0].mxu0
    %v702 = vadd.f32 0.0, %v701
    %v703 = vpop.f32.mrb[0].mxu0
    %704 = vdwg.mxu0
    %v705 = vmul.f32 %v687, %v241
    %v706 = vmul.f32 %v692, %v246
    %v707 = vmul.f32 %v697, %v251
    %v708 = vmul.f32 %v702, %v256
    %713 = vrot.lane.b32.xlu0 %v705, 64
    %v714 = vpop.permute.xlu0 %713
    %715 = vrot.lane.b32.xlu0 %v706, 64
    %v716 = vpop.permute.xlu0 %715
    %717 = vrot.lane.b32.xlu0 %v707, 64
    %v718 = vpop.permute.xlu0 %717
    %719 = vrot.lane.b32.xlu0 %v708, 64
    %v720 = vpop.permute.xlu0 %719
    %v725 = vadd.f32 %v525, %v714
    %v726 = vadd.f32 %v526, %v716
    %v727 = vadd.f32 %v527, %v718
    %v728 = vadd.f32 %v528, %v720
    %v729 = vld [vmem:[#allocation3 + $0x8] sm:$0xff]
    %v730 = vld [vmem:[#allocation3 + $0x10] sm:$0xff]
    %v731 = vld [vmem:[#allocation3 + $0x18] sm:$0xff]
    %v732 = vld [vmem:[#allocation3 + $0x20] sm:$0xff]
    %s733 = scalar_lea.vmem [#allocation9], 32
    %v734 = vld [vmem:[%s733] sm:$0xff]
    %v735 = vld [vmem:[%s733 + $0x8] sm:$0xff]
    %v736 = vld [vmem:[%s733 + $0x10] sm:$0xff]
    %v737 = vld [vmem:[%s733 + $0x18] sm:$0xff]
    %v739 = vsel %vm577, %v729, 0
    %v742 = vsel %vm577, %v730, 0
    %v745 = vsel %vm577, %v731, 0
    %v748 = vsel %vm577, %v732, 0
    %750 = vmatprep.subr.mxu0 0.0
    %751 = vmatpush1.msra.mxu0 %v734
    %752 = vmatprep.subr.mxu0 0.0
    %753 = vmatpush1.msra.mxu0 %v735
    %754 = vmatprep.subr.mxu0 0.0
    %755 = vmatpush1.msra.mxu0 %v736
    %756 = vmatprep.subr.mxu0 0.0
    %757 = vmatpush1.msra.mxu0 %v737
    %758 = vmatprep.subr.mxu0 0.0
    %759 = vmatpush1.msra.mxu0 0.0
    %760 = vmatprep.subr.mxu0 0.0
    %761 = vmatpush1.msra.mxu0 0.0
    %762 = vmatprep.subr.mxu0 0.0
    %763 = vmatpush1.msra.mxu0 0.0
    %764 = vmatprep.subr.mxu0 0.0
    %765 = vmatpush1.msra.mxu0 0.0
    %766 = vmatprep.subr.mxu0 0.0
    %767 = vmatpush1.msra.mxu0 0.0
    %768 = vmatprep.subr.mxu0 0.0
    %769 = vmatpush1.msra.mxu0 0.0
    %770 = vmatprep.subr.mxu0 0.0
    %771 = vmatpush1.msra.mxu0 0.0
    %772 = vmatprep.subr.mxu0 0.0
    %773 = vmatpush1.msra.mxu0 0.0
    %774 = vmatprep.subr.mxu0 0.0
    %775 = vmatpush1.msra.mxu0 0.0
    %776 = vmatprep.subr.mxu0 0.0
    %777 = vmatpush1.msra.mxu0 0.0
    %778 = vmatprep.subr.mxu0 0.0
    %779 = vmatpush1.msra.mxu0 0.0
    %780 = vmatprep.subr.mxu0 0.0
    %781 = vmatpush1.msra.mxu0 0.0
    %782 = vmatprep.subr.mxu0 0.0
    %783 = vmatpush1.msra.mxu0 0.0
    %784 = vmatprep.subr.mxu0 0.0
    %785 = vmatpush1.msra.mxu0 0.0
    %786 = vmatprep.subr.mxu0 0.0
    %787 = vmatpush1.msra.mxu0 0.0
    %788 = vmatprep.subr.mxu0 0.0
    %789 = vmatpush1.msra.mxu0 0.0
    %790 = vmatprep.subr.mxu0 0.0
    %791 = vmatpush1.msra.mxu0 0.0
    %792 = vmatprep.subr.mxu0 0.0
    %793 = vmatpush1.msra.mxu0 0.0
    %794 = vmatprep.subr.mxu0 0.0
    %795 = vmatpush1.msra.mxu0 0.0
    %796 = vmatprep.subr.mxu0 0.0
    %797 = vmatpush1.msra.mxu0 0.0
    %798 = vmatprep.subr.mxu0 0.0
    %799 = vmatpush1.msra.mxu0 0.0
    %800 = vmatprep.subr.mxu0 0.0
    %801 = vmatpush1.msra.mxu0 0.0
    %802 = vmatprep.subr.mxu0 0.0
    %803 = vmatpush1.msra.mxu0 0.0
    %804 = vmatprep.subr.mxu0 0.0
    %805 = vmatpush1.msra.mxu0 0.0
    %806 = vmatprep.subr.mxu0 0.0
    %807 = vmatpush1.msra.mxu0 0.0
    %808 = vmatprep.subr.mxu0 0.0
    %809 = vmatpush1.msra.mxu0 0.0
    %810 = vmatprep.subr.mxu0 0.0
    %811 = vmatpush1.msra.mxu0 0.0
    %812 = vmatprep.subr.mxu0 0.0
    %813 = vmatpush1.msra.mxu0 0.0
    %814 = vmatprep.mubr.f32.mxu0 0.0
    %815 = vmatmul.mubr.f32.gmra.mrb[0].mxu0 %v739
    %v816 = vpop.f32.mrb[0].mxu0
    %v817 = vadd.f32 0.0, %v816
    %v818 = vpop.f32.mrb[0].mxu0
    %819 = vmatprep.mubr.f32.mxu0 0.0
    %820 = vmatmul.mubr.f32.gmra.mrb[0].mxu0 %v742
    %v821 = vpop.f32.mrb[0].mxu0
    %v822 = vadd.f32 0.0, %v821
    %v823 = vpop.f32.mrb[0].mxu0
    %824 = vmatprep.mubr.f32.mxu0 0.0
    %825 = vmatmul.mubr.f32.gmra.mrb[0].mxu0 %v745
    %v826 = vpop.f32.mrb[0].mxu0
    %v827 = vadd.f32 0.0, %v826
    %v828 = vpop.f32.mrb[0].mxu0
    %829 = vmatprep.mubr.f32.mxu0 0.0
    %830 = vmatmul.mubr.f32.gmra.mrb[0].mxu0 %v748
    %v831 = vpop.f32.mrb[0].mxu0
    %v832 = vadd.f32 0.0, %v831
    %v833 = vpop.f32.mrb[0].mxu0
    %834 = vdwg.mxu0
    %839 = vrot.lane.b32.xlu0 %v817, 64
    %v840 = vpop.permute.xlu0 %839
    %841 = vrot.lane.b32.xlu0 %v822, 64
    %v842 = vpop.permute.xlu0 %841
    %843 = vrot.lane.b32.xlu0 %v827, 64
    %v844 = vpop.permute.xlu0 %843
    %845 = vrot.lane.b32.xlu0 %v832, 64
    %v846 = vpop.permute.xlu0 %845
    %v851 = vadd.f32 %v725, %v840
    %v852 = vadd.f32 %v726, %v842
    %v853 = vadd.f32 %v727, %v844
    %v854 = vadd.f32 %v728, %v846
    %v855 = vld [vmem:[#allocation3 + $0x9] sm:$0xff]
    %v856 = vld [vmem:[#allocation3 + $0x11] sm:$0xff]
    %v857 = vld [vmem:[#allocation3 + $0x19] sm:$0xff]
    %v858 = vld [vmem:[#allocation3 + $0x21] sm:$0xff]
    %s859 = scalar_lea.vmem [#allocation9], 64
    %v860 = vld [vmem:[%s859] sm:$0xff]
    %v861 = vld [vmem:[%s859 + $0x8] sm:$0xff]
    %v862 = vld [vmem:[%s859 + $0x10] sm:$0xff]
    %v863 = vld [vmem:[%s859 + $0x18] sm:$0xff]
    %v865 = vsel %vm577, %v855, 0
    %v868 = vsel %vm577, %v856, 0
    %v871 = vsel %vm577, %v857, 0
    %v874 = vsel %vm577, %v858, 0
    %876 = vmatprep.subr.mxu0 0.0
    %877 = vmatpush1.msra.mxu0 %v860
    %878 = vmatprep.subr.mxu0 0.0
    %879 = vmatpush1.msra.mxu0 %v861
    %880 = vmatprep.subr.mxu0 0.0
    %881 = vmatpush1.msra.mxu0 %v862
    %882 = vmatprep.subr.mxu0 0.0
    %883 = vmatpush1.msra.mxu0 %v863
    %884 = vmatprep.subr.mxu0 0.0
    %885 = vmatpush1.msra.mxu0 0.0
    %886 = vmatprep.subr.mxu0 0.0
    %887 = vmatpush1.msra.mxu0 0.0
    %888 = vmatprep.subr.mxu0 0.0
    %889 = vmatpush1.msra.mxu0 0.0
    %890 = vmatprep.subr.mxu0 0.0
    %891 = vmatpush1.msra.mxu0 0.0
    %892 = vmatprep.subr.mxu0 0.0
    %893 = vmatpush1.msra.mxu0 0.0
    %894 = vmatprep.subr.mxu0 0.0
    %895 = vmatpush1.msra.mxu0 0.0
    %896 = vmatprep.subr.mxu0 0.0
    %897 = vmatpush1.msra.mxu0 0.0
    %898 = vmatprep.subr.mxu0 0.0
    %899 = vmatpush1.msra.mxu0 0.0
    %900 = vmatprep.subr.mxu0 0.0
    %901 = vmatpush1.msra.mxu0 0.0
    %902 = vmatprep.subr.mxu0 0.0
    %903 = vmatpush1.msra.mxu0 0.0
    %904 = vmatprep.subr.mxu0 0.0
    %905 = vmatpush1.msra.mxu0 0.0
    %906 = vmatprep.subr.mxu0 0.0
    %907 = vmatpush1.msra.mxu0 0.0
    %908 = vmatprep.subr.mxu0 0.0
    %909 = vmatpush1.msra.mxu0 0.0
    %910 = vmatprep.subr.mxu0 0.0
    %911 = vmatpush1.msra.mxu0 0.0
    %912 = vmatprep.subr.mxu0 0.0
    %913 = vmatpush1.msra.mxu0 0.0
    %914 = vmatprep.subr.mxu0 0.0
    %915 = vmatpush1.msra.mxu0 0.0
    %916 = vmatprep.subr.mxu0 0.0
    %917 = vmatpush1.msra.mxu0 0.0
    %918 = vmatprep.subr.mxu0 0.0
    %919 = vmatpush1.msra.mxu0 0.0
    %920 = vmatprep.subr.mxu0 0.0
    %921 = vmatpush1.msra.mxu0 0.0
    %922 = vmatprep.subr.mxu0 0.0
    %923 = vmatpush1.msra.mxu0 0.0
    %924 = vmatprep.subr.mxu0 0.0
    %925 = vmatpush1.msra.mxu0 0.0
    %926 = vmatprep.subr.mxu0 0.0
    %927 = vmatpush1.msra.mxu0 0.0
    %928 = vmatprep.subr.mxu0 0.0
    %929 = vmatpush1.msra.mxu0 0.0
    %930 = vmatprep.subr.mxu0 0.0
    %931 = vmatpush1.msra.mxu0 0.0
    %932 = vmatprep.subr.mxu0 0.0
    %933 = vmatpush1.msra.mxu0 0.0
    %934 = vmatprep.subr.mxu0 0.0
    %935 = vmatpush1.msra.mxu0 0.0
    %936 = vmatprep.subr.mxu0 0.0
    %937 = vmatpush1.msra.mxu0 0.0
    %938 = vmatprep.subr.mxu0 0.0
    %939 = vmatpush1.msra.mxu0 0.0
    %940 = vmatprep.mubr.f32.mxu0 0.0
    %941 = vmatmul.mubr.f32.gmra.mrb[0].mxu0 %v865
    %v942 = vpop.f32.mrb[0].mxu0
    %v943 = vadd.f32 0.0, %v942
    %v944 = vpop.f32.mrb[0].mxu0
    %945 = vmatprep.mubr.f32.mxu0 0.0
    %946 = vmatmul.mubr.f32.gmra.mrb[0].mxu0 %v868
    %v947 = vpop.f32.mrb[0].mxu0
    %v948 = vadd.f32 0.0, %v947
    %v949 = vpop.f32.mrb[0].mxu0
    %950 = vmatprep.mubr.f32.mxu0 0.0
    %951 = vmatmul.mubr.f32.gmra.mrb[0].mxu0 %v871
    %v952 = vpop.f32.mrb[0].mxu0
    %v953 = vadd.f32 0.0, %v952
    %v954 = vpop.f32.mrb[0].mxu0
    %955 = vmatprep.mubr.f32.mxu0 0.0
    %956 = vmatmul.mubr.f32.gmra.mrb[0].mxu0 %v874
    %v957 = vpop.f32.mrb[0].mxu0
    %v958 = vadd.f32 0.0, %v957
    %v959 = vpop.f32.mrb[0].mxu0
    %960 = vdwg.mxu0
    %v961 = vmul.f32 %v943, %v493
    %v962 = vmul.f32 %v948, %v498
    %v963 = vmul.f32 %v953, %v503
    %v964 = vmul.f32 %v958, %v508
    %969 = vrot.lane.b32.xlu0 %v961, 64
    %v970 = vpop.permute.xlu0 %969
    %971 = vrot.lane.b32.xlu0 %v962, 64
    %v972 = vpop.permute.xlu0 %971
    %973 = vrot.lane.b32.xlu0 %v963, 64
    %v974 = vpop.permute.xlu0 %973
    %975 = vrot.lane.b32.xlu0 %v964, 64
    %v976 = vpop.permute.xlu0 %975
    %v981 = vadd.f32 %v851, %v970
    %v982 = vadd.f32 %v852, %v972
    %v983 = vadd.f32 %v853, %v974
    %v984 = vadd.f32 %v854, %v976
    %v985 = vtanh.pop %v981
    %v986 = vtanh.pop %v982
    %v987 = vtanh.pop %v983
    %v988 = vtanh.pop %v984
    %v989 = vmul.f32 %v546, %v553
    %v990 = vmul.f32 %v548, %v554
    %v991 = vmul.f32 %v550, %v555
    %v992 = vmul.f32 %v552, %v556
    %v993 = vsub.f32 1.0, %v546
    %v994 = vsub.f32 1.0, %v548
    %v995 = vsub.f32 1.0, %v550
    %v996 = vsub.f32 1.0, %v552
    %1001 = vrot.lane.b32.xlu0 %v985, 64
    %v1002 = vpop.permute.xlu0 %1001
    %1003 = vrot.lane.b32.xlu0 %v986, 64
    %v1004 = vpop.permute.xlu0 %1003
    %1005 = vrot.lane.b32.xlu0 %v987, 64
    %v1006 = vpop.permute.xlu0 %1005
    %1007 = vrot.lane.b32.xlu0 %v988, 64
    %v1008 = vpop.permute.xlu0 %1007
    %v1013 = vmul.f32 %v993, %v1002
    %v1014 = vmul.f32 %v994, %v1004
    %v1015 = vmul.f32 %v995, %v1006
    %v1016 = vmul.f32 %v996, %v1008
    %v1017 = vadd.f32 %v989, %v1013
    %v1018 = vadd.f32 %v990, %v1014
    %v1019 = vadd.f32 %v991, %v1015
    %v1020 = vadd.f32 %v992, %v1016
    %1021 = vst.msk [vmem:[#allocation10] sm:$0xff] %vm577, %v1017
    %1022 = vst.msk [vmem:[#allocation10 + $0x8] sm:$0xff] %vm577, %v1018
    %1023 = vst.msk [vmem:[#allocation10 + $0x10] sm:$0xff] %vm577, %v1019
    %1024 = vst.msk [vmem:[#allocation10 + $0x18] sm:$0xff] %vm577, %v1020
    // Predicated region
    $region38: #{tpu_custom_call.1} parent=1 // pred_check
      _
    $region39: #{tpu_custom_call.1} parent=1 // pred_check_branch
      %1026 = sbr.rel (0) target = $region41
    $region40: #{tpu_custom_call.1} parent=1 // pred_region
      %s1028 = ssub.s32 512, 512
      %1029 = vsyncadd [#allocation6], %s1028
      %s1030 = sshll.u32 [#allocation10], 4
      %s1031 = int_to_ptr.vmem [resolvable:$true] %s1030
      %1036 = dma.vmem_to_hbm [thread:$0]  %s1031, 512, %s6, [#allocation6], 128, 128, 8
    $region41: #{tpu_custom_call.1} parent=1 // pred_fallthru
      _
    // Predicated region
    $region42: #{tpu_custom_call.1} parent=1 // pred_check
      _
    $region43: #{tpu_custom_call.1} parent=1 // pred_check_branch
      %1038 = sbr.rel (0) target = $region45
    $region44: #{tpu_custom_call.1} parent=1 // pred_region
      %1039 = dma.done [#allocation6], 512
    $region45: #{tpu_custom_call.1} parent=1 // pred_fallthru
      _
    %1040 = vsyncpa [#allocation5], 1
    %1041 = vsyncpa [#allocation8], 1
    %1042 = vsyncpa [#allocation6], 1

</llo_original>
